<compile_context>
chip_gen: v7x
topology: tpu7x:2x2x1
jax: 0.10.0
libtpu: 0.0.40
codegen_flags: <defaults>
</compile_context>

<pallas_src>
import functools

import jax
import jax.numpy as jnp
from jax import lax
from jax.experimental import pallas as pl
from jax.experimental.pallas import tpu as pltpu


# ----------------------------------------------------------------------------
# Config (matches module defaults, scaled down to a small node_in)
# ----------------------------------------------------------------------------
NODE_IN = 32
NODE_OUT = 2
HIDDEN_LAYER = 3
OUT_TOTAL = NODE_OUT * 2 + (NODE_OUT ** 2 - NODE_OUT) // 2  # = 5
BN_EPS = 1e-5


def decreasing_nodes(node_in, node_out, hidden_layer):
    """Replicates nodeframe.decreasingNode: geometric decrease node_in -> node_out."""
    factor = (node_in / node_out) ** (1.0 / (hidden_layer + 1))
    nodes = [int(round(node_in / factor ** i)) for i in range(hidden_layer + 2)]
    nodes[0] = node_in
    nodes[-1] = node_out
    return nodes


NODES = decreasing_nodes(NODE_IN, OUT_TOTAL, HIDDEN_LAYER)  # e.g. [32, 20, 13, 8, 5]
NUM_LAYERS = len(NODES) - 1


def _softplus(x):
    # PyTorch nn.Softplus(beta=1, threshold=20): x > 20 -> x, else log(1 + exp(x))
    return jnp.where(x > 20.0, x, jnp.log1p(jnp.exp(jnp.minimum(x, 20.0))))


# ----------------------------------------------------------------------------
# Pallas kernel: full MLP (BN/bias pre-folded) + Softplus on the diag head.
# Layout inside the kernel: features on sublanes, batch on lanes.
# ----------------------------------------------------------------------------
def mlp_kernel(x_ref, *refs, num_layers, node_out):
    out_ref = refs[-1]
    prefs = refs[:-1]

    h = x_ref[...]                                   # (NODE_IN, tile_b)
    for li in range(num_layers):
        w = prefs[2 * li][...]                       # (out_i, in_i)  (BN-folded)
        b = prefs[2 * li + 1][...]                   # (out_i, 1), broadcasts over lanes
        h = jnp.dot(w, h, preferred_element_type=jnp.float32) + b
        if li < num_layers - 1:
            h = _softplus(h)                         # mainActive='Softplus'

    # Softplus only on the Cholesky-diagonal head rows [node_out : 2*node_out)
    row = lax.broadcasted_iota(jnp.int32, h.shape, dimension=0)
    diag_mask = (row >= node_out) & (row < 2 * node_out)
    out_ref[...] = jnp.where(diag_mask, _softplus(h), h)


# ----------------------------------------------------------------------------
# Wrapper
# ----------------------------------------------------------------------------
def prepare_kernel_params(params):
    """Fold BN (inference, running stats) + bias into the Linear weights and
    transpose to the kernel's (out_i, in_i) / (out_i, 1) layout."""
    kp = []
    for li in range(NUM_LAYERS):
        w = params[f"w{li}"]                         # (in_i, out_i)
        b = params[f"b{li}"]                         # (1, out_i)
        if li < NUM_LAYERS - 1:
            scale = params[f"scale{li}"]             # (1, out_i) = gamma/sqrt(var+eps)
            shift = params[f"shift{li}"]             # (1, out_i) = beta - mean*scale
            w = w * scale                            # fold BN into weights (exact)
            b = b * scale + shift
        kp.append(jnp.asarray(w.T))                  # (out_i, in_i)
        kp.append(jnp.asarray(b.T))                  # (out_i, 1)
    return kp


def mlp_multivariate_gaussian(x, params, *, tile_b=256):
    """x: (B, NODE_IN) f32. Returns (params (B, node_out, 1), cholesky_factor (B, node_out, node_out))."""
    B = x.shape[0]
    tile_b = min(tile_b, B)
    assert B % tile_b == 0, "batch must be divisible by tile_b"

    flat_args = prepare_kernel_params(params)

    def full_spec(shape):
        return pl.BlockSpec(shape, lambda i: tuple(0 for _ in shape))

    in_specs = [pl.BlockSpec((NODE_IN, tile_b), lambda i: (0, i))]      # x^T tile
    in_specs += [full_spec(a.shape) for a in flat_args]                 # resident params

    kernel = functools.partial(mlp_kernel, num_layers=NUM_LAYERS, node_out=NODE_OUT)

    raw_t = pl.pallas_call(
        kernel,
        out_shape=jax.ShapeDtypeStruct((OUT_TOTAL, B), jnp.float32),
        grid_spec=pltpu.PrefetchScalarGridSpec(
            num_scalar_prefetch=0,
            grid=(B // tile_b,),
            in_specs=in_specs,
            out_specs=pl.BlockSpec((OUT_TOTAL, tile_b), lambda i: (0, i)),
        ),
        compiler_params=pltpu.CompilerParams(dimension_semantics=("parallel",)),
    )(x.T, *flat_args)

    raw = raw_t.T                                    # (B, OUT_TOTAL)

    # --- glue: slice heads and assemble outputs (matches PyTorch semantics) ---
    no = NODE_OUT
    mu = raw[:, :no].reshape(-1, no, 1)              # params.view(-1, node_out, 1)
    chol_diag = raw[:, no:2 * no]                    # Softplus already applied in kernel
    chol_off = raw[:, 2 * no:]                       # (B, (no^2 - no)//2)

    eye = jnp.eye(no, dtype=raw.dtype)
    chol = chol_diag[:, :, None] * eye[None]         # torch.diag_embed
    iu = jnp.triu_indices(no, k=1)                   # torch.triu_indices(no, no, offset=1)
    chol = chol.at[:, iu[0], iu[1]].set(chol_off)
    return mu, chol


# ----------------------------------------------------------------------------
# Pure-JAX reference (for a loose sanity check of the kernel math)
# ----------------------------------------------------------------------------
def mlp_reference(x, params):
    h = x
    for li in range(NUM_LAYERS):
        h = h @ params[f"w{li}"] + params[f"b{li}"]
        if li < NUM_LAYERS - 1:
            h = h * params[f"scale{li}"] + params[f"shift{li}"]
            h = _softplus(h)
    no = NODE_OUT
    mu = h[:, :no].reshape(-1, no, 1)
    chol_diag = _softplus(h[:, no:2 * no])
    chol = chol_diag[:, :, None] * jnp.eye(no, dtype=h.dtype)[None]
    iu = jnp.triu_indices(no, k=1)
    chol = chol.at[:, iu[0], iu[1]].set(h[:, 2 * no:])
    return mu, chol


# ----------------------------------------------------------------------------
# Deterministic parameter construction (shapes from __init__; inference-mode BN)
# ----------------------------------------------------------------------------
def init_params(key):
    params = {}
    for li in range(NUM_LAYERS):
        fan_in, fan_out = NODES[li], NODES[li + 1]
        key, kw, kb, kg, kbe, km, kv = jax.random.split(key, 7)
        bound = 1.0 / jnp.sqrt(fan_in)
        params[f"w{li}"] = jax.random.uniform(kw, (fan_in, fan_out), jnp.float32, -bound, bound)
        params[f"b{li}"] = jax.random.uniform(kb, (1, fan_out), jnp.float32, -bound, bound)
        if li < NUM_LAYERS - 1:
            gamma = 1.0 + 0.1 * jax.random.normal(kg, (1, fan_out), jnp.float32)
            beta = 0.1 * jax.random.normal(kbe, (1, fan_out), jnp.float32)
            mean = 0.1 * jax.random.normal(km, (1, fan_out), jnp.float32)
            var = 1.0 + 0.1 * jnp.abs(jax.random.normal(kv, (1, fan_out), jnp.float32))
            scale = gamma / jnp.sqrt(var + BN_EPS)
            params[f"scale{li}"] = scale
            params[f"shift{li}"] = beta - mean * scale
    return params


if __name__ == "__main__":
    key = jax.random.PRNGKey(0)
    kx, kp = jax.random.split(key)
    B = 512  # 2 parallel grid steps at tile_b=256 (keeps both v7x TCs busy)
    x = jax.random.normal(kx, (B, NODE_IN), jnp.float32)
    params = init_params(kp)

    mu, chol = jax.jit(functools.partial(mlp_multivariate_gaussian, tile_b=256))(x, params)
    jax.block_until_ready((mu, chol))

    assert mu.shape == (B, NODE_OUT, 1)
    assert chol.shape == (B, NODE_OUT, NODE_OUT)
    # diagonal must be positive (Softplus) and strictly-lower triangle must be zero
    assert bool(jnp.all(jnp.diagonal(chol, axis1=1, axis2=2) > 0))
    assert bool(jnp.all(chol[:, 1, 0] == 0.0))

    # loose numerical parity against a pure-JAX reference
    mu_ref, chol_ref = mlp_reference(x, params)
    assert bool(jnp.allclose(mu, mu_ref, rtol=1e-3, atol=1e-3))
    assert bool(jnp.allclose(chol, chol_ref, rtol=1e-3, atol=1e-3))

    print("KERNEL_OK")
</pallas_src>

<mosaic_0001>
module attributes {stable_mosaic.version = 11 : i64} {
  func.func @mlp_kernel(%arg0: i32, %arg1: memref<32x256xf32, #tpu.memory_space<vmem>>, %arg2: memref<20x32xf32, #tpu.memory_space<vmem>>, %arg3: memref<20x1xf32, #tpu.memory_space<vmem>>, %arg4: memref<13x20xf32, #tpu.memory_space<vmem>>, %arg5: memref<13x1xf32, #tpu.memory_space<vmem>>, %arg6: memref<8x13xf32, #tpu.memory_space<vmem>>, %arg7: memref<8x1xf32, #tpu.memory_space<vmem>>, %arg8: memref<5x8xf32, #tpu.memory_space<vmem>>, %arg9: memref<5x1xf32, #tpu.memory_space<vmem>>, %arg10: memref<5x256xf32, #tpu.memory_space<vmem>>) attributes {dimension_semantics = [#tpu.dimension_semantics<parallel>], iteration_bounds = array<i64: 2>, scalar_prefetch = 0 : i64, scratch_operands = 0 : i64, tpu.core_type = #tpu.core_type<tc>, window_params = [{transform_indices = @transform_0, window_bounds = array<i64: 32, 256>}, {pipeline_mode = #tpu.pipeline_mode<synchronous>, transform_indices = @transform_1, window_bounds = array<i64: 20, 32>}, {pipeline_mode = #tpu.pipeline_mode<synchronous>, transform_indices = @transform_2, window_bounds = array<i64: 20, 1>}, {pipeline_mode = #tpu.pipeline_mode<synchronous>, transform_indices = @transform_3, window_bounds = array<i64: 13, 20>}, {pipeline_mode = #tpu.pipeline_mode<synchronous>, transform_indices = @transform_4, window_bounds = array<i64: 13, 1>}, {pipeline_mode = #tpu.pipeline_mode<synchronous>, transform_indices = @transform_5, window_bounds = array<i64: 8, 13>}, {pipeline_mode = #tpu.pipeline_mode<synchronous>, transform_indices = @transform_6, window_bounds = array<i64: 8, 1>}, {pipeline_mode = #tpu.pipeline_mode<synchronous>, transform_indices = @transform_7, window_bounds = array<i64: 5, 8>}, {pipeline_mode = #tpu.pipeline_mode<synchronous>, transform_indices = @transform_8, window_bounds = array<i64: 5, 1>}, {transform_indices = @transform_9, window_bounds = array<i64: 5, 256>}]} {
    %c0 = arith.constant 0 : index
    %c0_0 = arith.constant 0 : index
    %0 = vector.load %arg1[%c0, %c0_0] : memref<32x256xf32, #tpu.memory_space<vmem>>, vector<32x256xf32>
    %c0_1 = arith.constant 0 : index
    %c0_2 = arith.constant 0 : index
    %1 = vector.load %arg2[%c0_1, %c0_2] : memref<20x32xf32, #tpu.memory_space<vmem>>, vector<20x32xf32>
    %c0_3 = arith.constant 0 : index
    %c0_4 = arith.constant 0 : index
    %2 = vector.load %arg3[%c0_3, %c0_4] : memref<20x1xf32, #tpu.memory_space<vmem>>, vector<20x1xf32>
    %cst = arith.constant dense<0.000000e+00> : vector<20x256xf32>
    %3 = tpu.matmul %1, %0, %cst {dimension_numbers = #tpu.dot_dimension_numbers<[1], [0], [0], [1], [0, 0, 1, 1], [], []>} : vector<20x32xf32>, vector<32x256xf32>, vector<20x256xf32> -> vector<20x256xf32>
    %4 = vector.broadcast %2 : vector<20x1xf32> to vector<20x256xf32>
    %5 = arith.addf %3, %4 : vector<20x256xf32>
    %cst_5 = arith.constant 2.000000e+01 : f32
    %6 = vector.broadcast %cst_5 : f32 to vector<20x256xf32>
    %7 = arith.cmpf ogt, %5, %6 : vector<20x256xf32>
    %cst_6 = arith.constant 2.000000e+01 : f32
    %8 = vector.broadcast %cst_6 : f32 to vector<20x256xf32>
    %9 = arith.minimumf %5, %8 : vector<20x256xf32>
    %10 = math.exp %9 : vector<20x256xf32>
    %11 = math.log1p %10 : vector<20x256xf32>
    %12 = arith.select %7, %5, %11 : vector<20x256xi1>, vector<20x256xf32>
    %c0_7 = arith.constant 0 : index
    %c0_8 = arith.constant 0 : index
    %13 = vector.load %arg4[%c0_7, %c0_8] : memref<13x20xf32, #tpu.memory_space<vmem>>, vector<13x20xf32>
    %c0_9 = arith.constant 0 : index
    %c0_10 = arith.constant 0 : index
    %14 = vector.load %arg5[%c0_9, %c0_10] : memref<13x1xf32, #tpu.memory_space<vmem>>, vector<13x1xf32>
    %cst_11 = arith.constant dense<0.000000e+00> : vector<13x256xf32>
    %15 = tpu.matmul %13, %12, %cst_11 {dimension_numbers = #tpu.dot_dimension_numbers<[1], [0], [0], [1], [0, 0, 1, 1], [], []>} : vector<13x20xf32>, vector<20x256xf32>, vector<13x256xf32> -> vector<13x256xf32>
    %16 = vector.broadcast %14 : vector<13x1xf32> to vector<13x256xf32>
    %17 = arith.addf %15, %16 : vector<13x256xf32>
    %cst_12 = arith.constant 2.000000e+01 : f32
    %18 = vector.broadcast %cst_12 : f32 to vector<13x256xf32>
    %19 = arith.cmpf ogt, %17, %18 : vector<13x256xf32>
    %cst_13 = arith.constant 2.000000e+01 : f32
    %20 = vector.broadcast %cst_13 : f32 to vector<13x256xf32>
    %21 = arith.minimumf %17, %20 : vector<13x256xf32>
    %22 = math.exp %21 : vector<13x256xf32>
    %23 = math.log1p %22 : vector<13x256xf32>
    %24 = arith.select %19, %17, %23 : vector<13x256xi1>, vector<13x256xf32>
    %c0_14 = arith.constant 0 : index
    %c0_15 = arith.constant 0 : index
    %25 = vector.load %arg6[%c0_14, %c0_15] : memref<8x13xf32, #tpu.memory_space<vmem>>, vector<8x13xf32>
    %c0_16 = arith.constant 0 : index
    %c0_17 = arith.constant 0 : index
    %26 = vector.load %arg7[%c0_16, %c0_17] : memref<8x1xf32, #tpu.memory_space<vmem>>, vector<8x1xf32>
    %cst_18 = arith.constant dense<0.000000e+00> : vector<8x256xf32>
    %27 = tpu.matmul %25, %24, %cst_18 {dimension_numbers = #tpu.dot_dimension_numbers<[1], [0], [0], [1], [0, 0, 1, 1], [], []>} : vector<8x13xf32>, vector<13x256xf32>, vector<8x256xf32> -> vector<8x256xf32>
    %28 = vector.broadcast %26 : vector<8x1xf32> to vector<8x256xf32>
    %29 = arith.addf %27, %28 : vector<8x256xf32>
    %cst_19 = arith.constant 2.000000e+01 : f32
    %30 = vector.broadcast %cst_19 : f32 to vector<8x256xf32>
    %31 = arith.cmpf ogt, %29, %30 : vector<8x256xf32>
    %cst_20 = arith.constant 2.000000e+01 : f32
    %32 = vector.broadcast %cst_20 : f32 to vector<8x256xf32>
    %33 = arith.minimumf %29, %32 : vector<8x256xf32>
    %34 = math.exp %33 : vector<8x256xf32>
    %35 = math.log1p %34 : vector<8x256xf32>
    %36 = arith.select %31, %29, %35 : vector<8x256xi1>, vector<8x256xf32>
    %c0_21 = arith.constant 0 : index
    %c0_22 = arith.constant 0 : index
    %37 = vector.load %arg8[%c0_21, %c0_22] : memref<5x8xf32, #tpu.memory_space<vmem>>, vector<5x8xf32>
    %c0_23 = arith.constant 0 : index
    %c0_24 = arith.constant 0 : index
    %38 = vector.load %arg9[%c0_23, %c0_24] : memref<5x1xf32, #tpu.memory_space<vmem>>, vector<5x1xf32>
    %cst_25 = arith.constant dense<0.000000e+00> : vector<5x256xf32>
    %39 = tpu.matmul %37, %36, %cst_25 {dimension_numbers = #tpu.dot_dimension_numbers<[1], [0], [0], [1], [0, 0, 1, 1], [], []>} : vector<5x8xf32>, vector<8x256xf32>, vector<5x256xf32> -> vector<5x256xf32>
    %40 = vector.broadcast %38 : vector<5x1xf32> to vector<5x256xf32>
    %41 = arith.addf %39, %40 : vector<5x256xf32>
    %42 = tpu.iota {dimensions = array<i32: 0>} : vector<5x256xi32>
    %c2_i32 = arith.constant 2 : i32
    %43 = vector.broadcast %c2_i32 : i32 to vector<5x256xi32>
    %44 = arith.cmpi sge, %42, %43 : vector<5x256xi32>
    %c4_i32 = arith.constant 4 : i32
    %45 = vector.broadcast %c4_i32 : i32 to vector<5x256xi32>
    %46 = arith.cmpi slt, %42, %45 : vector<5x256xi32>
    %47 = arith.andi %44, %46 : vector<5x256xi1>
    %cst_26 = arith.constant 2.000000e+01 : f32
    %48 = vector.broadcast %cst_26 : f32 to vector<5x256xf32>
    %49 = arith.cmpf ogt, %41, %48 : vector<5x256xf32>
    %cst_27 = arith.constant 2.000000e+01 : f32
    %50 = vector.broadcast %cst_27 : f32 to vector<5x256xf32>
    %51 = arith.minimumf %41, %50 : vector<5x256xf32>
    %52 = math.exp %51 : vector<5x256xf32>
    %53 = math.log1p %52 : vector<5x256xf32>
    %54 = arith.select %49, %41, %53 : vector<5x256xi1>, vector<5x256xf32>
    %55 = arith.select %47, %54, %41 : vector<5x256xi1>, vector<5x256xf32>
    %c0_28 = arith.constant 0 : index
    %c0_29 = arith.constant 0 : index
    %56 = vector.load %arg10[%c0_28, %c0_29] : memref<5x256xf32, #tpu.memory_space<vmem>>, vector<5x256xf32>
    tpu.vector_store %arg10[%c0_28, %c0_29], %55 {strides = array<i32>} : memref<5x256xf32, #tpu.memory_space<vmem>>, vector<5x256xf32>,
    return
  }
  func.func @transform_0(%arg0: i32) -> (i32, i32) {
    %c0_i32 = arith.constant 0 : i32
    %c0_i32_0 = arith.constant 0 : i32
    return %c0_i32, %arg0 : i32, i32
  }
  func.func @transform_1(%arg0: i32) -> (i32, i32) {
    %c0_i32 = arith.constant 0 : i32
    %c0_i32_0 = arith.constant 0 : i32
    %c0_i32_1 = arith.constant 0 : i32
    return %c0_i32, %c0_i32_0 : i32, i32
  }
  func.func @transform_2(%arg0: i32) -> (i32, i32) {
    %c0_i32 = arith.constant 0 : i32
    %c0_i32_0 = arith.constant 0 : i32
    %c0_i32_1 = arith.constant 0 : i32
    return %c0_i32, %c0_i32_0 : i32, i32
  }
  func.func @transform_3(%arg0: i32) -> (i32, i32) {
    %c0_i32 = arith.constant 0 : i32
    %c0_i32_0 = arith.constant 0 : i32
    %c0_i32_1 = arith.constant 0 : i32
    return %c0_i32, %c0_i32_0 : i32, i32
  }
  func.func @transform_4(%arg0: i32) -> (i32, i32) {
    %c0_i32 = arith.constant 0 : i32
    %c0_i32_0 = arith.constant 0 : i32
    %c0_i32_1 = arith.constant 0 : i32
    return %c0_i32, %c0_i32_0 : i32, i32
  }
  func.func @transform_5(%arg0: i32) -> (i32, i32) {
    %c0_i32 = arith.constant 0 : i32
    %c0_i32_0 = arith.constant 0 : i32
    %c0_i32_1 = arith.constant 0 : i32
    return %c0_i32, %c0_i32_0 : i32, i32
  }
  func.func @transform_6(%arg0: i32) -> (i32, i32) {
    %c0_i32 = arith.constant 0 : i32
    %c0_i32_0 = arith.constant 0 : i32
    %c0_i32_1 = arith.constant 0 : i32
    return %c0_i32, %c0_i32_0 : i32, i32
  }
  func.func @transform_7(%arg0: i32) -> (i32, i32) {
    %c0_i32 = arith.constant 0 : i32
    %c0_i32_0 = arith.constant 0 : i32
    %c0_i32_1 = arith.constant 0 : i32
    return %c0_i32, %c0_i32_0 : i32, i32
  }
  func.func @transform_8(%arg0: i32) -> (i32, i32) {
    %c0_i32 = arith.constant 0 : i32
    %c0_i32_0 = arith.constant 0 : i32
    %c0_i32_1 = arith.constant 0 : i32
    return %c0_i32, %c0_i32_0 : i32, i32
  }
  func.func @transform_9(%arg0: i32) -> (i32, i32) {
    %c0_i32 = arith.constant 0 : i32
    %c0_i32_0 = arith.constant 0 : i32
    return %c0_i32, %arg0 : i32, i32
  }
}

</mosaic_0001>

<llo_original>
// kernel: mlp_multivariate_gaussian.1
$region0: #{mlp_multivariate_gaussian.1}
  #allocation0 [shape = 'u32[]', space=smem, size = 0x4, offset = 0x4, fixed_abs, tag = 'smem constant byte address 0x4 - core index']
  #allocation1 [shape = 'u32[144,128]{1,0:T(1,128)}', space=vmem, size = 0x12000, scoped, tag = 'internal scratch']
  %s0 = inlined_call_operand.vmem [shape: f32[32,512], index: 0, kind: input, shape index: {}]
  %s1 = inlined_call_operand.vmem [shape: f32[20,32], index: 1, kind: input, shape index: {}]
  %s2 = inlined_call_operand.vmem [shape: f32[20,1], index: 2, kind: input, shape index: {}]
  %s3 = inlined_call_operand.vmem [shape: f32[13,20], index: 3, kind: input, shape index: {}]
  %s4 = inlined_call_operand.vmem [shape: f32[13,1], index: 4, kind: input, shape index: {}]
  %s5 = inlined_call_operand.vmem [shape: f32[8,13], index: 5, kind: input, shape index: {}]
  %s6 = inlined_call_operand.vmem [shape: f32[8,1], index: 6, kind: input, shape index: {}]
  %s7 = inlined_call_operand.vmem [shape: f32[5,8], index: 7, kind: input, shape index: {}]
  %s8 = inlined_call_operand.vmem [shape: f32[5,1], index: 8, kind: input, shape index: {}]
  %s9 = inlined_call_operand.vmem [shape: f32[5,512], index: 9, kind: output, shape index: {}]
  %s10 = sld [smem:[#allocation0]]
  $region92: #{mlp_multivariate_gaussian.1} parent=0
    _
  %s12 = ssub.s32 1, %s10
  %s13 = scalar_select 0, %s12, %s10
  $region1: #{mlp_multivariate_gaussian.1} parent=0
    #allocation2 [shape = 'u8[65536]{0}', space=vmem, size = 0x10000, scoped, tag = 'input window, operand 0']
    loop: start=0, step=1, limit=4
    $region2: #{mlp_multivariate_gaussian.1} parent=1 // loop_pre_header
      _
    $region3: #{mlp_multivariate_gaussian.1} parent=1 // loop_header
      %s15 = sphi 0, %s19
      %p16 = scmp.ge.s32.totalorder %s15, 4
      %s25 = sphi 0, %s27
      %s28 = sphi 0, %s25
      %s29 = sphi 0, %s28
      %s45 = sphi 0, %s29
      %s49 = sphi 0, %s49
      %s51 = sphi 0, %s49
      %s52 = sphi 0, %s51
      %s66 = sphi 0, %s52
      %s70 = sphi 0, %s70
      %s72 = sphi 0, %s70
      %s73 = sphi 0, %s72
      %s87 = sphi 0, %s73
      %s91 = sphi 0, %s91
      %s93 = sphi 0, %s91
      %s94 = sphi 0, %s93
      %s108 = sphi 0, %s94
      %s112 = sphi 0, %s112
      %s114 = sphi 0, %s112
      %s115 = sphi 0, %s114
      %s129 = sphi 0, %s115
      %s133 = sphi 0, %s133
      %s135 = sphi 0, %s133
      %s136 = sphi 0, %s135
      %s150 = sphi 0, %s136
      %s154 = sphi 0, %s154
      %s156 = sphi 0, %s154
      %s157 = sphi 0, %s156
      %s171 = sphi 0, %s157
      %s175 = sphi 0, %s175
      %s177 = sphi 0, %s175
      %s178 = sphi 0, %s177
      %s192 = sphi 0, %s178
      %s196 = sphi 0, %s196
      %s198 = sphi 0, %s196
      %s199 = sphi 0, %s198
      %s213 = sphi 0, %s199
      %s219 = sphi 0, %s221
      %s222 = sphi 0, %s219
      %s223 = sphi 0, %s222
      %s239 = sphi 0, %s223
    $region4: #{mlp_multivariate_gaussian.1} parent=1 // loop_header_branch
      %18 = sbr.rel (%p16) target = $region8
    $region5: #{mlp_multivariate_gaussian.1} parent=1 // loop_body
      %s20 = ssub.s32 %s15, 1
      %s21 = ssub.s32 %s15, 2
      %s22 = sadd.s32 %s15, 1
      %s23 = ssub.s32 %s15, %s22
      %p24 = scmp.eq.s32.totalorder %s23, 0
      %s26 = sadd.s32 %s25, 1
      %s27 = scalar_select %p24, %s25, %s26
      %p30 = pneg %p24
      %p31 = scmp.eq.s32.totalorder %s15, 1
      %p32 = por %p30, %p31
      %p33 = scmp.ne.s32.totalorder %s25, %s28
      %p34 = scmp.eq.s32.totalorder %s15, 0
      %p35 = por %p33, %p34
      %p36 = scmp.ne.s32.totalorder %s25, %s28
      %p37 = scmp.eq.s32.totalorder %s20, 1
      %p38 = por %p36, %p37
      %p39 = scmp.ne.s32.totalorder %s28, %s29
      %p40 = scmp.eq.s32.totalorder %s20, 0
      %p41 = por %p39, %p40
      %p42 = scmp.ne.s32.totalorder %s28, %s29
      %p43 = scmp.eq.s32.totalorder %s21, 1
      %p44 = por %p42, %p43
      %p46 = scmp.ne.s32.totalorder %s29, %s45
      %p47 = scmp.eq.s32.totalorder %s21, 0
      %p48 = por %p46, %p47
      %s50 = sadd.s32 %s49, 1
      %p53 = scmp.eq.s32.totalorder %s15, 1
      %p54 = scmp.ne.s32.totalorder %s49, %s51
      %p55 = scmp.eq.s32.totalorder %s15, 0
      %p56 = por %p54, %p55
      %p57 = scmp.ne.s32.totalorder %s49, %s51
      %p58 = scmp.eq.s32.totalorder %s20, 1
      %p59 = por %p57, %p58
      %p60 = scmp.ne.s32.totalorder %s51, %s52
      %p61 = scmp.eq.s32.totalorder %s20, 0
      %p62 = por %p60, %p61
      %p63 = scmp.ne.s32.totalorder %s51, %s52
      %p64 = scmp.eq.s32.totalorder %s21, 1
      %p65 = por %p63, %p64
      %p67 = scmp.ne.s32.totalorder %s52, %s66
      %p68 = scmp.eq.s32.totalorder %s21, 0
      %p69 = por %p67, %p68
      %s71 = sadd.s32 %s70, 1
      %p74 = scmp.eq.s32.totalorder %s15, 1
      %p75 = scmp.ne.s32.totalorder %s70, %s72
      %p76 = scmp.eq.s32.totalorder %s15, 0
      %p77 = por %p75, %p76
      %p78 = scmp.ne.s32.totalorder %s70, %s72
      %p79 = scmp.eq.s32.totalorder %s20, 1
      %p80 = por %p78, %p79
      %p81 = scmp.ne.s32.totalorder %s72, %s73
      %p82 = scmp.eq.s32.totalorder %s20, 0
      %p83 = por %p81, %p82
      %p84 = scmp.ne.s32.totalorder %s72, %s73
      %p85 = scmp.eq.s32.totalorder %s21, 1
      %p86 = por %p84, %p85
      %p88 = scmp.ne.s32.totalorder %s73, %s87
      %p89 = scmp.eq.s32.totalorder %s21, 0
      %p90 = por %p88, %p89
      %s92 = sadd.s32 %s91, 1
      %p95 = scmp.eq.s32.totalorder %s15, 1
      %p96 = scmp.ne.s32.totalorder %s91, %s93
      %p97 = scmp.eq.s32.totalorder %s15, 0
      %p98 = por %p96, %p97
      %p99 = scmp.ne.s32.totalorder %s91, %s93
      %p100 = scmp.eq.s32.totalorder %s20, 1
      %p101 = por %p99, %p100
      %p102 = scmp.ne.s32.totalorder %s93, %s94
      %p103 = scmp.eq.s32.totalorder %s20, 0
      %p104 = por %p102, %p103
      %p105 = scmp.ne.s32.totalorder %s93, %s94
      %p106 = scmp.eq.s32.totalorder %s21, 1
      %p107 = por %p105, %p106
      %p109 = scmp.ne.s32.totalorder %s94, %s108
      %p110 = scmp.eq.s32.totalorder %s21, 0
      %p111 = por %p109, %p110
      %s113 = sadd.s32 %s112, 1
      %p116 = scmp.eq.s32.totalorder %s15, 1
      %p117 = scmp.ne.s32.totalorder %s112, %s114
      %p118 = scmp.eq.s32.totalorder %s15, 0
      %p119 = por %p117, %p118
      %p120 = scmp.ne.s32.totalorder %s112, %s114
      %p121 = scmp.eq.s32.totalorder %s20, 1
      %p122 = por %p120, %p121
      %p123 = scmp.ne.s32.totalorder %s114, %s115
      %p124 = scmp.eq.s32.totalorder %s20, 0
      %p125 = por %p123, %p124
      %p126 = scmp.ne.s32.totalorder %s114, %s115
      %p127 = scmp.eq.s32.totalorder %s21, 1
      %p128 = por %p126, %p127
      %p130 = scmp.ne.s32.totalorder %s115, %s129
      %p131 = scmp.eq.s32.totalorder %s21, 0
      %p132 = por %p130, %p131
      %s134 = sadd.s32 %s133, 1
      %p137 = scmp.eq.s32.totalorder %s15, 1
      %p138 = scmp.ne.s32.totalorder %s133, %s135
      %p139 = scmp.eq.s32.totalorder %s15, 0
      %p140 = por %p138, %p139
      %p141 = scmp.ne.s32.totalorder %s133, %s135
      %p142 = scmp.eq.s32.totalorder %s20, 1
      %p143 = por %p141, %p142
      %p144 = scmp.ne.s32.totalorder %s135, %s136
      %p145 = scmp.eq.s32.totalorder %s20, 0
      %p146 = por %p144, %p145
      %p147 = scmp.ne.s32.totalorder %s135, %s136
      %p148 = scmp.eq.s32.totalorder %s21, 1
      %p149 = por %p147, %p148
      %p151 = scmp.ne.s32.totalorder %s136, %s150
      %p152 = scmp.eq.s32.totalorder %s21, 0
      %p153 = por %p151, %p152
      %s155 = sadd.s32 %s154, 1
      %p158 = scmp.eq.s32.totalorder %s15, 1
      %p159 = scmp.ne.s32.totalorder %s154, %s156
      %p160 = scmp.eq.s32.totalorder %s15, 0
      %p161 = por %p159, %p160
      %p162 = scmp.ne.s32.totalorder %s154, %s156
      %p163 = scmp.eq.s32.totalorder %s20, 1
      %p164 = por %p162, %p163
      %p165 = scmp.ne.s32.totalorder %s156, %s157
      %p166 = scmp.eq.s32.totalorder %s20, 0
      %p167 = por %p165, %p166
      %p168 = scmp.ne.s32.totalorder %s156, %s157
      %p169 = scmp.eq.s32.totalorder %s21, 1
      %p170 = por %p168, %p169
      %p172 = scmp.ne.s32.totalorder %s157, %s171
      %p173 = scmp.eq.s32.totalorder %s21, 0
      %p174 = por %p172, %p173
      %s176 = sadd.s32 %s175, 1
      %p179 = scmp.eq.s32.totalorder %s15, 1
      %p180 = scmp.ne.s32.totalorder %s175, %s177
      %p181 = scmp.eq.s32.totalorder %s15, 0
      %p182 = por %p180, %p181
      %p183 = scmp.ne.s32.totalorder %s175, %s177
      %p184 = scmp.eq.s32.totalorder %s20, 1
      %p185 = por %p183, %p184
      %p186 = scmp.ne.s32.totalorder %s177, %s178
      %p187 = scmp.eq.s32.totalorder %s20, 0
      %p188 = por %p186, %p187
      %p189 = scmp.ne.s32.totalorder %s177, %s178
      %p190 = scmp.eq.s32.totalorder %s21, 1
      %p191 = por %p189, %p190
      %p193 = scmp.ne.s32.totalorder %s178, %s192
      %p194 = scmp.eq.s32.totalorder %s21, 0
      %p195 = por %p193, %p194
      %s197 = sadd.s32 %s196, 1
      %p200 = scmp.eq.s32.totalorder %s15, 1
      %p201 = scmp.ne.s32.totalorder %s196, %s198
      %p202 = scmp.eq.s32.totalorder %s15, 0
      %p203 = por %p201, %p202
      %p204 = scmp.ne.s32.totalorder %s196, %s198
      %p205 = scmp.eq.s32.totalorder %s20, 1
      %p206 = por %p204, %p205
      %p207 = scmp.ne.s32.totalorder %s198, %s199
      %p208 = scmp.eq.s32.totalorder %s20, 0
      %p209 = por %p207, %p208
      %p210 = scmp.ne.s32.totalorder %s198, %s199
      %p211 = scmp.eq.s32.totalorder %s21, 1
      %p212 = por %p210, %p211
      %p214 = scmp.ne.s32.totalorder %s199, %s213
      %p215 = scmp.eq.s32.totalorder %s21, 0
      %p216 = por %p214, %p215
      %s217 = ssub.s32 %s15, %s22
      %p218 = scmp.eq.s32.totalorder %s217, 0
      %s220 = sadd.s32 %s219, 1
      %s221 = scalar_select %p218, %s219, %s220
      %p224 = pneg %p218
      %p225 = scmp.eq.s32.totalorder %s15, 1
      %p226 = por %p224, %p225
      %p227 = scmp.ne.s32.totalorder %s219, %s222
      %p228 = scmp.eq.s32.totalorder %s15, 0
      %p229 = por %p227, %p228
      %p230 = scmp.ne.s32.totalorder %s219, %s222
      %p231 = scmp.eq.s32.totalorder %s20, 1
      %p232 = por %p230, %p231
      %p233 = scmp.ne.s32.totalorder %s222, %s223
      %p234 = scmp.eq.s32.totalorder %s20, 0
      %p235 = por %p233, %p234
      %p236 = scmp.ne.s32.totalorder %s222, %s223
      %p237 = scmp.eq.s32.totalorder %s21, 1
      %p238 = por %p236, %p237
      %p240 = scmp.ne.s32.totalorder %s223, %s239
      %p241 = scmp.eq.s32.totalorder %s21, 0
      %p242 = por %p240, %p241
      %p243 = scmp.le.s32.totalorder 1, %s15
      %p244 = scmp.lt.s32.totalorder %s15, 3
      %p245 = pnand %p243, %p244
      %p246 = pneg %p245
      // Predicated region
      $region9: #{mlp_multivariate_gaussian.1} parent=5 // pred_check
        _
      $region10: #{mlp_multivariate_gaussian.1} parent=5 // pred_check_branch
        %248 = sbr.rel (%p245) target = $region12
      $region11: #{mlp_multivariate_gaussian.1} parent=5 // pred_region
        %s249 = ssub.s32 %s15, 1
        // Predicated region
        $region13: #{mlp_multivariate_gaussian.1} parent=11 // pred_check
          %p250 = pneg %p62
        $region14: #{mlp_multivariate_gaussian.1} parent=11 // pred_check_branch
          %252 = sbr.rel (%p250) target = $region16
        $region15: #{mlp_multivariate_gaussian.1} parent=11 // pred_region
          _
        $region16: #{mlp_multivariate_gaussian.1} parent=11 // pred_fallthru
          _
        // Predicated region
        $region17: #{mlp_multivariate_gaussian.1} parent=11 // pred_check
          %p253 = pneg %p83
        $region18: #{mlp_multivariate_gaussian.1} parent=11 // pred_check_branch
          %255 = sbr.rel (%p253) target = $region20
        $region19: #{mlp_multivariate_gaussian.1} parent=11 // pred_region
          _
        $region20: #{mlp_multivariate_gaussian.1} parent=11 // pred_fallthru
          _
        // Predicated region
        $region21: #{mlp_multivariate_gaussian.1} parent=11 // pred_check
          %p256 = pneg %p104
        $region22: #{mlp_multivariate_gaussian.1} parent=11 // pred_check_branch
          %258 = sbr.rel (%p256) target = $region24
        $region23: #{mlp_multivariate_gaussian.1} parent=11 // pred_region
          _
        $region24: #{mlp_multivariate_gaussian.1} parent=11 // pred_fallthru
          _
        // Predicated region
        $region25: #{mlp_multivariate_gaussian.1} parent=11 // pred_check
          %p259 = pneg %p125
        $region26: #{mlp_multivariate_gaussian.1} parent=11 // pred_check_branch
          %261 = sbr.rel (%p259) target = $region28
        $region27: #{mlp_multivariate_gaussian.1} parent=11 // pred_region
          _
        $region28: #{mlp_multivariate_gaussian.1} parent=11 // pred_fallthru
          _
        // Predicated region
        $region29: #{mlp_multivariate_gaussian.1} parent=11 // pred_check
          %p262 = pneg %p146
        $region30: #{mlp_multivariate_gaussian.1} parent=11 // pred_check_branch
          %264 = sbr.rel (%p262) target = $region32
        $region31: #{mlp_multivariate_gaussian.1} parent=11 // pred_region
          _
        $region32: #{mlp_multivariate_gaussian.1} parent=11 // pred_fallthru
          _
        // Predicated region
        $region33: #{mlp_multivariate_gaussian.1} parent=11 // pred_check
          %p265 = pneg %p167
        $region34: #{mlp_multivariate_gaussian.1} parent=11 // pred_check_branch
          %267 = sbr.rel (%p265) target = $region36
        $region35: #{mlp_multivariate_gaussian.1} parent=11 // pred_region
          _
        $region36: #{mlp_multivariate_gaussian.1} parent=11 // pred_fallthru
          _
        // Predicated region
        $region37: #{mlp_multivariate_gaussian.1} parent=11 // pred_check
          %p268 = pneg %p188
        $region38: #{mlp_multivariate_gaussian.1} parent=11 // pred_check_branch
          %270 = sbr.rel (%p268) target = $region40
        $region39: #{mlp_multivariate_gaussian.1} parent=11 // pred_region
          _
        $region40: #{mlp_multivariate_gaussian.1} parent=11 // pred_fallthru
          _
        // Predicated region
        $region41: #{mlp_multivariate_gaussian.1} parent=11 // pred_check
          %p271 = pneg %p209
        $region42: #{mlp_multivariate_gaussian.1} parent=11 // pred_check_branch
          %273 = sbr.rel (%p271) target = $region44
        $region43: #{mlp_multivariate_gaussian.1} parent=11 // pred_region
          _
        $region44: #{mlp_multivariate_gaussian.1} parent=11 // pred_fallthru
          _
      $region12: #{mlp_multivariate_gaussian.1} parent=5 // pred_fallthru
        _
      %p274 = scmp.lt.s32.totalorder %s15, 2
      // Predicated region
      $region45: #{mlp_multivariate_gaussian.1} parent=5 // pred_check
        %p275 = pneg %p274
      $region46: #{mlp_multivariate_gaussian.1} parent=5 // pred_check_branch
        %277 = sbr.rel (%p275) target = $region48
      $region47: #{mlp_multivariate_gaussian.1} parent=5 // pred_region
        // Predicated region
        $region49: #{mlp_multivariate_gaussian.1} parent=47 // pred_check
          %p278 = pneg %p35
        $region50: #{mlp_multivariate_gaussian.1} parent=47 // pred_check_branch
          %280 = sbr.rel (%p278) target = $region52
        $region51: #{mlp_multivariate_gaussian.1} parent=47 // pred_region
          %s281 = sand.u32 %s25, 1
          %s282 = sand.u32 %s25, 1
          %s283 = smul.addr %s282, 64
          %s284 = scalar_lea.vmem [#allocation2], %s283
          %s285 = smul.u32 2, %s15
          %s286 = smul.addr %s285, 8
          %s287 = scalar_lea.vmem %s0, %s286
          // Predicated region
          $region53: #{mlp_multivariate_gaussian.1} parent=51 // pred_check
            _
          $region54: #{mlp_multivariate_gaussian.1} parent=51 // pred_check_branch
            %289 = sbr.rel (0) target = $region56
          $region55: #{mlp_multivariate_gaussian.1} parent=51 // pred_region
            // Predicated region
            $region57: #{mlp_multivariate_gaussian.1} parent=55 // pred_check
              _
            $region58: #{mlp_multivariate_gaussian.1} parent=55 // pred_check_branch
              %291 = sbr.rel (0) target = $region60
            $region59: #{mlp_multivariate_gaussian.1} parent=55 // pred_region
              loop: start=0, step=1, limit=1
              $region61: #{mlp_multivariate_gaussian.1} parent=59 // loop_pre_header
                _
              $region62: #{mlp_multivariate_gaussian.1} parent=59 // loop_header
                %s293 = sphi 0, %s297
                %p294 = scmp.ge.s32.totalorder %s293, 1
                %s298 = sphi %s287, %s287
                %s299 = sphi %s284, %s284
              $region63: #{mlp_multivariate_gaussian.1} parent=59 // loop_header_branch
                %296 = sbr.rel (%p294) target = $region67
              $region64: #{mlp_multivariate_gaussian.1} parent=59 // loop_body
                %v300 = vld [vmem:[%s298] sm:$0xff]
                %301 = vst [vmem:[%s299] sm:$0xff] %v300
                %v302 = vld [vmem:[%s298 + $0x8] sm:$0xff]
                %303 = vst [vmem:[%s299 + $0x8] sm:$0xff] %v302
                %v304 = vld [vmem:[%s298 + $0x20] sm:$0xff]
                %305 = vst [vmem:[%s299 + $0x10] sm:$0xff] %v304
                %v306 = vld [vmem:[%s298 + $0x28] sm:$0xff]
                %307 = vst [vmem:[%s299 + $0x18] sm:$0xff] %v306
                %v308 = vld [vmem:[%s298 + $0x40] sm:$0xff]
                %309 = vst [vmem:[%s299 + $0x20] sm:$0xff] %v308
                %v310 = vld [vmem:[%s298 + $0x48] sm:$0xff]
                %311 = vst [vmem:[%s299 + $0x28] sm:$0xff] %v310
                %v312 = vld [vmem:[%s298 + $0x60] sm:$0xff]
                %313 = vst [vmem:[%s299 + $0x30] sm:$0xff] %v312
                %v314 = vld [vmem:[%s298 + $0x68] sm:$0xff]
                %315 = vst [vmem:[%s299 + $0x38] sm:$0xff] %v314
              $region65: #{mlp_multivariate_gaussian.1} parent=59 // loop_footer
                %s297 = sadd.s32 1, %s293
              $region66: #{mlp_multivariate_gaussian.1} parent=59 // loop_footer_branch
                %292 = sbr.rel target = $region62
              $region67: #{mlp_multivariate_gaussian.1} parent=59 // loop_exit
                _
            $region60: #{mlp_multivariate_gaussian.1} parent=55 // pred_fallthru
              _
            // Predicated region
            $region68: #{mlp_multivariate_gaussian.1} parent=55 // pred_check
              _
            $region69: #{mlp_multivariate_gaussian.1} parent=55 // pred_check_branch
              %317 = sbr.rel target = $region71
            $region70: #{mlp_multivariate_gaussian.1} parent=55 // pred_region
              _
            $region71: #{mlp_multivariate_gaussian.1} parent=55 // pred_fallthru
              _
          $region56: #{mlp_multivariate_gaussian.1} parent=51 // pred_fallthru
            _
          %318 = vnop
        $region52: #{mlp_multivariate_gaussian.1} parent=47 // pred_fallthru
          _
      $region48: #{mlp_multivariate_gaussian.1} parent=5 // pred_fallthru
        _
      %p319 = scmp.le.s32.totalorder 1, %s15
      %p320 = scmp.lt.s32.totalorder %s15, 3
      %p321 = pnand %p319, %p320
      %p322 = pneg %p321
      // Predicated region
      $region72: #{mlp_multivariate_gaussian.1} parent=5 // pred_check
        _
      $region73: #{mlp_multivariate_gaussian.1} parent=5 // pred_check_branch
        %324 = sbr.rel (%p321) target = $region75
      $region74: #{mlp_multivariate_gaussian.1} parent=5 // pred_region
        %s325 = ssub.s32 %s15, 1
        %s326 = sand.u32 %s28, 1
        %s327 = sand.u32 %s28, 1
        %s328 = smul.addr %s327, 64
        %s329 = scalar_lea.vmem [#allocation2], %s328
        // Predicated region
        $region76: #{mlp_multivariate_gaussian.1} parent=74 // pred_check
          %p330 = pneg %p41
        $region77: #{mlp_multivariate_gaussian.1} parent=74 // pred_check_branch
          %332 = sbr.rel (%p330) target = $region79
        $region78: #{mlp_multivariate_gaussian.1} parent=74 // pred_region
          _
        $region79: #{mlp_multivariate_gaussian.1} parent=74 // pred_fallthru
          _
        %s333 = sand.u32 %s28, 1
        %s334 = sand.u32 %s28, 1
        %s335 = smul.addr %s334, 64
        %s336 = scalar_lea.vmem [#allocation2], %s335
        %p337 = pneg %p41
        %p338 = pneg %p38
        %p339 = pneg %p62
        %p340 = pneg %p59
        %p341 = pneg %p83
        %p342 = pneg %p80
        %p343 = pneg %p104
        %p344 = pneg %p101
        %p345 = pneg %p125
        %p346 = pneg %p122
        %p347 = pneg %p146
        %p348 = pneg %p143
        %p349 = pneg %p167
        %p350 = pneg %p164
        %p351 = pneg %p188
        %p352 = pneg %p185
        %p353 = pneg %p209
        %p354 = pneg %p206
        %p355 = pneg %p235
        %p356 = pneg %p232
        %s357 = smul.u32 2, %s20
        %p358 = scmp.lt.s32.totalorder %s357, 3
        %s359 = scalar_select %p358, %s357, 3
        %s360 = smul.addr %s359, 8
        %s361 = scalar_lea.vmem %s9, %s360
        %s362 = smul.u32 2, %s20
        %s363 = smul.u32 2, %s20
        %p364 = scmp.lt.s32.totalorder %s363, 3
        %s365 = scalar_select %p364, %s363, 3
        %s366 = smul.addr %s365, 8
        %s367 = scalar_lea.vmem %s9, %s366
        %s368 = smul.u32 2, %s20
        %v369 = vld [vmem:[%s329] sm:$0xff]
        %v370 = vld [vmem:[%s329 + $0x8] sm:$0xff]
        %v371 = vld [vmem:[%s329 + $0x10] sm:$0xff]
        %v372 = vld [vmem:[%s329 + $0x18] sm:$0xff]
        %v373 = vld [vmem:[%s329 + $0x20] sm:$0xff]
        %v374 = vld [vmem:[%s329 + $0x28] sm:$0xff]
        %v375 = vld [vmem:[%s329 + $0x30] sm:$0xff]
        %v376 = vld [vmem:[%s329 + $0x38] sm:$0xff]
        %v377 = vld [vmem:[%s1] sm:$0xff]
        %v378 = vld [vmem:[%s1 + $0x8] sm:$0xff]
        %v379 = vld [vmem:[%s1 + $0x10] sm:$0xf]
        %v380 = vld [vmem:[%s2] sm:$0xff]
        %v381 = vld [vmem:[%s2 + $0x8] sm:$0xff]
        %v382 = vld [vmem:[%s2 + $0x10] sm:$0xf]
        %384 = vset.pattern.permute.xlu0 0
        %385 = vperm.xlu0 %384, %v380
        %v386 = vpop.permute.xlu0 %385
        %389 = vset.pattern.permute.xlu0 0
        %390 = vperm.xlu0 %389, %v381
        %v391 = vpop.permute.xlu0 %390
        %394 = vset.pattern.permute.xlu0 0
        %395 = vperm.xlu0 %394, %v382
        %v396 = vpop.permute.xlu0 %395
        %vm398 = vcmask 261120
        %v400 = vsel %vm398, %v377, 0
        %v403 = vsel %vm398, %v378, 0
        %v406 = vsel %vm398, %v379, 0
        %408 = vmatprep.subr.mxu0 %v370
        %409 = vmatpush1.msra.mxu0 %v369
        %410 = vmatprep.subr.mxu0 %v372
        %411 = vmatpush1.msra.mxu0 %v371
        %412 = vmatprep.subr.mxu0 %v374
        %413 = vmatpush1.msra.mxu0 %v373
        %414 = vmatprep.subr.mxu0 %v376
        %415 = vmatpush1.msra.mxu0 %v375
        %416 = vmatprep.subr.mxu0 0.0
        %417 = vmatpush1.msra.mxu0 0.0
        %418 = vmatprep.subr.mxu0 0.0
        %419 = vmatpush1.msra.mxu0 0.0
        %420 = vmatprep.subr.mxu0 0.0
        %421 = vmatpush1.msra.mxu0 0.0
        %422 = vmatprep.subr.mxu0 0.0
        %423 = vmatpush1.msra.mxu0 0.0
        %424 = vmatprep.subr.mxu0 0.0
        %425 = vmatpush1.msra.mxu0 0.0
        %426 = vmatprep.subr.mxu0 0.0
        %427 = vmatpush1.msra.mxu0 0.0
        %428 = vmatprep.subr.mxu0 0.0
        %429 = vmatpush1.msra.mxu0 0.0
        %430 = vmatprep.subr.mxu0 0.0
        %431 = vmatpush1.msra.mxu0 0.0
        %432 = vmatprep.subr.mxu0 0.0
        %433 = vmatpush1.msra.mxu0 0.0
        %434 = vmatprep.subr.mxu0 0.0
        %435 = vmatpush1.msra.mxu0 0.0
        %436 = vmatprep.subr.mxu0 0.0
        %437 = vmatpush1.msra.mxu0 0.0
        %438 = vmatprep.subr.mxu0 0.0
        %439 = vmatpush1.msra.mxu0 0.0
        %440 = vmatprep.subr.mxu0 0.0
        %441 = vmatpush1.msra.mxu0 0.0
        %442 = vmatprep.subr.mxu0 0.0
        %443 = vmatpush1.msra.mxu0 0.0
        %444 = vmatprep.subr.mxu0 0.0
        %445 = vmatpush1.msra.mxu0 0.0
        %446 = vmatprep.subr.mxu0 0.0
        %447 = vmatpush1.msra.mxu0 0.0
        %448 = vmatprep.subr.mxu0 0.0
        %449 = vmatpush1.msra.mxu0 0.0
        %450 = vmatprep.subr.mxu0 0.0
        %451 = vmatpush1.msra.mxu0 0.0
        %452 = vmatprep.subr.mxu0 0.0
        %453 = vmatpush1.msra.mxu0 0.0
        %454 = vmatprep.subr.mxu0 0.0
        %455 = vmatpush1.msra.mxu0 0.0
        %456 = vmatprep.subr.mxu0 0.0
        %457 = vmatpush1.msra.mxu0 0.0
        %458 = vmatprep.subr.mxu0 0.0
        %459 = vmatpush1.msra.mxu0 0.0
        %460 = vmatprep.subr.mxu0 0.0
        %461 = vmatpush1.msra.mxu0 0.0
        %462 = vmatprep.subr.mxu0 0.0
        %463 = vmatpush1.msra.mxu0 0.0
        %464 = vmatprep.subr.mxu0 0.0
        %465 = vmatpush1.msra.mxu0 0.0
        %466 = vmatprep.subr.mxu0 0.0
        %467 = vmatpush1.msra.mxu0 0.0
        %468 = vmatprep.subr.mxu0 0.0
        %469 = vmatpush1.msra.mxu0 0.0
        %470 = vmatprep.subr.mxu0 0.0
        %471 = vmatpush1.msra.mxu0 0.0
        %472 = vmatprep.mubr.f32.mxu0 0.0
        %473 = vmatmul.mubr.f32.gmra.mrb[0].mxu0 %v400
        %v474 = vpop.f32.mrb[0].mxu0
        %v475 = vadd.f32 %v386, %v474
        %v476 = vpop.f32.mrb[0].mxu0
        %v477 = vadd.f32 %v386, %v476
        %478 = vmatprep.mubr.f32.mxu0 0.0
        %479 = vmatmul.mubr.f32.gmra.mrb[0].mxu0 %v403
        %v480 = vpop.f32.mrb[0].mxu0
        %v481 = vadd.f32 %v391, %v480
        %v482 = vpop.f32.mrb[0].mxu0
        %v483 = vadd.f32 %v391, %v482
        %484 = vmatprep.mubr.f32.mxu0 0.0
        %485 = vmatmul.mubr.f32.gmra.mrb[0].mxu0 %v406
        %v486 = vpop.f32.mrb[0].mxu0
        %v487 = vadd.f32 %v396, %v486
        %v488 = vpop.f32.mrb[0].mxu0
        %v489 = vadd.f32 %v396, %v488
        %490 = vdwg.mxu0
        %vm491 = vcmp.gt.f32.partialorder %v475, 20.0
        %vm492 = vcmp.gt.f32.partialorder %v477, 20.0
        %vm493 = vcmp.gt.f32.partialorder %v481, 20.0
        %vm494 = vcmp.gt.f32.partialorder %v483, 20.0
        %vm495 = vcmp.gt.f32.partialorder %v487, 20.0
        %vm496 = vcmp.gt.f32.partialorder %v489, 20.0
        %v497 = vmin.f32 %v475, 20.0
        %v498 = vmin.f32 %v477, 20.0
        %v499 = vmin.f32 %v481, 20.0
        %v500 = vmin.f32 %v483, 20.0
        %v501 = vmin.f32 %v487, 20.0
        %v502 = vmin.f32 %v489, 20.0
        %v503 = vmul.f32 %v497, 1.442695
        %v504 = vpow.pop %v503
        %v505 = vmul.f32 %v498, 1.442695
        %v506 = vpow.pop %v505
        %v507 = vmul.f32 %v499, 1.442695
        %v508 = vpow.pop %v507
        %v509 = vmul.f32 %v500, 1.442695
        %v510 = vpow.pop %v509
        %v511 = vmul.f32 %v501, 1.442695
        %v512 = vpow.pop %v511
        %v513 = vmul.f32 %v502, 1.442695
        %v514 = vpow.pop %v513
        %v515 = vadd.f32 %v504, 1.0
        %v516 = vlog2.pop %v515
        %v517 = vmul.f32 %v516, 0.6931472
        %v518 = vmul.f32 -0.5, %v504
        %v519 = vadd.f32 %v518, 1.0
        %v520 = vmul.f32 %v519, %v504
        %v521 = vand.u32 2147483647, %v504
        %vm522 = vcmp.lt.f32.partialorder %v521, 0.0004427343
        %v523 = vsel %vm522, %v520, %v517
        %v524 = vadd.f32 %v506, 1.0
        %v525 = vlog2.pop %v524
        %v526 = vmul.f32 %v525, 0.6931472
        %v527 = vmul.f32 -0.5, %v506
        %v528 = vadd.f32 %v527, 1.0
        %v529 = vmul.f32 %v528, %v506
        %v530 = vand.u32 2147483647, %v506
        %vm531 = vcmp.lt.f32.partialorder %v530, 0.0004427343
        %v532 = vsel %vm531, %v529, %v526
        %v533 = vadd.f32 %v508, 1.0
        %v534 = vlog2.pop %v533
        %v535 = vmul.f32 %v534, 0.6931472
        %v536 = vmul.f32 -0.5, %v508
        %v537 = vadd.f32 %v536, 1.0
        %v538 = vmul.f32 %v537, %v508
        %v539 = vand.u32 2147483647, %v508
        %vm540 = vcmp.lt.f32.partialorder %v539, 0.0004427343
        %v541 = vsel %vm540, %v538, %v535
        %v542 = vadd.f32 %v510, 1.0
        %v543 = vlog2.pop %v542
        %v544 = vmul.f32 %v543, 0.6931472
        %v545 = vmul.f32 -0.5, %v510
        %v546 = vadd.f32 %v545, 1.0
        %v547 = vmul.f32 %v546, %v510
        %v548 = vand.u32 2147483647, %v510
        %vm549 = vcmp.lt.f32.partialorder %v548, 0.0004427343
        %v550 = vsel %vm549, %v547, %v544
        %v551 = vadd.f32 %v512, 1.0
        %v552 = vlog2.pop %v551
        %v553 = vmul.f32 %v552, 0.6931472
        %v554 = vmul.f32 -0.5, %v512
        %v555 = vadd.f32 %v554, 1.0
        %v556 = vmul.f32 %v555, %v512
        %v557 = vand.u32 2147483647, %v512
        %vm558 = vcmp.lt.f32.partialorder %v557, 0.0004427343
        %v559 = vsel %vm558, %v556, %v553
        %v560 = vadd.f32 %v514, 1.0
        %v561 = vlog2.pop %v560
        %v562 = vmul.f32 %v561, 0.6931472
        %v563 = vmul.f32 -0.5, %v514
        %v564 = vadd.f32 %v563, 1.0
        %v565 = vmul.f32 %v564, %v514
        %v566 = vand.u32 2147483647, %v514
        %vm567 = vcmp.lt.f32.partialorder %v566, 0.0004427343
        %v568 = vsel %vm567, %v565, %v562
        %v569 = vsel %vm491, %v475, %v523
        %v570 = vsel %vm492, %v477, %v532
        %v571 = vsel %vm493, %v481, %v541
        %v572 = vsel %vm494, %v483, %v550
        %v573 = vsel %vm495, %v487, %v559
        %v574 = vsel %vm496, %v489, %v568
        %v575 = vld [vmem:[%s3] sm:$0xff]
        %v576 = vld [vmem:[%s3 + $0x8] sm:$0x1f]
        %v577 = vld [vmem:[%s4] sm:$0xff]
        %v578 = vld [vmem:[%s4 + $0x8] sm:$0x1f]
        %580 = vset.pattern.permute.xlu0 0
        %581 = vperm.xlu0 %580, %v577
        %v582 = vpop.permute.xlu0 %581
        %585 = vset.pattern.permute.xlu0 0
        %586 = vperm.xlu0 %585, %v578
        %v587 = vpop.permute.xlu0 %586
        %vm589 = vcmask 162816
        %v591 = vsel %vm589, %v575, 0
        %v594 = vsel %vm589, %v576, 0
        %vm596 = vcmask 1043456
        %v598 = vsel %vm596, %v573, 0
        %v601 = vsel %vm596, %v574, 0
        %603 = vmatprep.subr.mxu0 %v570
        %604 = vmatpush1.msra.mxu0 %v569
        %605 = vmatprep.subr.mxu0 %v572
        %606 = vmatpush1.msra.mxu0 %v571
        %607 = vmatprep.subr.mxu0 %v601
        %608 = vmatpush1.msra.mxu0 %v598
        %609 = vmatprep.subr.mxu0 0.0
        %610 = vmatpush1.msra.mxu0 0.0
        %611 = vmatprep.subr.mxu0 0.0
        %612 = vmatpush1.msra.mxu0 0.0
        %613 = vmatprep.subr.mxu0 0.0
        %614 = vmatpush1.msra.mxu0 0.0
        %615 = vmatprep.subr.mxu0 0.0
        %616 = vmatpush1.msra.mxu0 0.0
        %617 = vmatprep.subr.mxu0 0.0
        %618 = vmatpush1.msra.mxu0 0.0
        %619 = vmatprep.subr.mxu0 0.0
        %620 = vmatpush1.msra.mxu0 0.0
        %621 = vmatprep.subr.mxu0 0.0
        %622 = vmatpush1.msra.mxu0 0.0
        %623 = vmatprep.subr.mxu0 0.0
        %624 = vmatpush1.msra.mxu0 0.0
        %625 = vmatprep.subr.mxu0 0.0
        %626 = vmatpush1.msra.mxu0 0.0
        %627 = vmatprep.subr.mxu0 0.0
        %628 = vmatpush1.msra.mxu0 0.0
        %629 = vmatprep.subr.mxu0 0.0
        %630 = vmatpush1.msra.mxu0 0.0
        %631 = vmatprep.subr.mxu0 0.0
        %632 = vmatpush1.msra.mxu0 0.0
        %633 = vmatprep.subr.mxu0 0.0
        %634 = vmatpush1.msra.mxu0 0.0
        %635 = vmatprep.subr.mxu0 0.0
        %636 = vmatpush1.msra.mxu0 0.0
        %637 = vmatprep.subr.mxu0 0.0
        %638 = vmatpush1.msra.mxu0 0.0
        %639 = vmatprep.subr.mxu0 0.0
        %640 = vmatpush1.msra.mxu0 0.0
        %641 = vmatprep.subr.mxu0 0.0
        %642 = vmatpush1.msra.mxu0 0.0
        %643 = vmatprep.subr.mxu0 0.0
        %644 = vmatpush1.msra.mxu0 0.0
        %645 = vmatprep.subr.mxu0 0.0
        %646 = vmatpush1.msra.mxu0 0.0
        %647 = vmatprep.subr.mxu0 0.0
        %648 = vmatpush1.msra.mxu0 0.0
        %649 = vmatprep.subr.mxu0 0.0
        %650 = vmatpush1.msra.mxu0 0.0
        %651 = vmatprep.subr.mxu0 0.0
        %652 = vmatpush1.msra.mxu0 0.0
        %653 = vmatprep.subr.mxu0 0.0
        %654 = vmatpush1.msra.mxu0 0.0
        %655 = vmatprep.subr.mxu0 0.0
        %656 = vmatpush1.msra.mxu0 0.0
        %657 = vmatprep.subr.mxu0 0.0
        %658 = vmatpush1.msra.mxu0 0.0
        %659 = vmatprep.subr.mxu0 0.0
        %660 = vmatpush1.msra.mxu0 0.0
        %661 = vmatprep.subr.mxu0 0.0
        %662 = vmatpush1.msra.mxu0 0.0
        %663 = vmatprep.subr.mxu0 0.0
        %664 = vmatpush1.msra.mxu0 0.0
        %665 = vmatprep.subr.mxu0 0.0
        %666 = vmatpush1.msra.mxu0 0.0
        %667 = vmatprep.mubr.f32.mxu0 0.0
        %668 = vmatmul.mubr.f32.gmra.mrb[0].mxu0 %v591
        %v669 = vpop.f32.mrb[0].mxu0
        %v670 = vadd.f32 %v582, %v669
        %v671 = vpop.f32.mrb[0].mxu0
        %v672 = vadd.f32 %v582, %v671
        %673 = vmatprep.mubr.f32.mxu0 0.0
        %674 = vmatmul.mubr.f32.gmra.mrb[0].mxu0 %v594
        %v675 = vpop.f32.mrb[0].mxu0
        %v676 = vadd.f32 %v587, %v675
        %v677 = vpop.f32.mrb[0].mxu0
        %v678 = vadd.f32 %v587, %v677
        %679 = vdwg.mxu0
        %vm680 = vcmp.gt.f32.partialorder %v670, 20.0
        %vm681 = vcmp.gt.f32.partialorder %v672, 20.0
        %vm682 = vcmp.gt.f32.partialorder %v676, 20.0
        %vm683 = vcmp.gt.f32.partialorder %v678, 20.0
        %v684 = vmin.f32 %v670, 20.0
        %v685 = vmin.f32 %v672, 20.0
        %v686 = vmin.f32 %v676, 20.0
        %v687 = vmin.f32 %v678, 20.0
        %v688 = vmul.f32 %v684, 1.442695
        %v689 = vpow.pop %v688
        %v690 = vmul.f32 %v685, 1.442695
        %v691 = vpow.pop %v690
        %v692 = vmul.f32 %v686, 1.442695
        %v693 = vpow.pop %v692
        %v694 = vmul.f32 %v687, 1.442695
        %v695 = vpow.pop %v694
        %v696 = vadd.f32 %v689, 1.0
        %v697 = vlog2.pop %v696
        %v698 = vmul.f32 %v697, 0.6931472
        %v699 = vmul.f32 -0.5, %v689
        %v700 = vadd.f32 %v699, 1.0
        %v701 = vmul.f32 %v700, %v689
        %v702 = vand.u32 2147483647, %v689
        %vm703 = vcmp.lt.f32.partialorder %v702, 0.0004427343
        %v704 = vsel %vm703, %v701, %v698
        %v705 = vadd.f32 %v691, 1.0
        %v706 = vlog2.pop %v705
        %v707 = vmul.f32 %v706, 0.6931472
        %v708 = vmul.f32 -0.5, %v691
        %v709 = vadd.f32 %v708, 1.0
        %v710 = vmul.f32 %v709, %v691
        %v711 = vand.u32 2147483647, %v691
        %vm712 = vcmp.lt.f32.partialorder %v711, 0.0004427343
        %v713 = vsel %vm712, %v710, %v707
        %v714 = vadd.f32 %v693, 1.0
        %v715 = vlog2.pop %v714
        %v716 = vmul.f32 %v715, 0.6931472
        %v717 = vmul.f32 -0.5, %v693
        %v718 = vadd.f32 %v717, 1.0
        %v719 = vmul.f32 %v718, %v693
        %v720 = vand.u32 2147483647, %v693
        %vm721 = vcmp.lt.f32.partialorder %v720, 0.0004427343
        %v722 = vsel %vm721, %v719, %v716
        %v723 = vadd.f32 %v695, 1.0
        %v724 = vlog2.pop %v723
        %v725 = vmul.f32 %v724, 0.6931472
        %v726 = vmul.f32 -0.5, %v695
        %v727 = vadd.f32 %v726, 1.0
        %v728 = vmul.f32 %v727, %v695
        %v729 = vand.u32 2147483647, %v695
        %vm730 = vcmp.lt.f32.partialorder %v729, 0.0004427343
        %v731 = vsel %vm730, %v728, %v725
        %v732 = vsel %vm680, %v670, %v704
        %v733 = vsel %vm681, %v672, %v713
        %v734 = vsel %vm682, %v676, %v722
        %v735 = vsel %vm683, %v678, %v731
        %v736 = vld [vmem:[%s5] sm:$0xff]
        %v737 = vld [vmem:[%s6] sm:$0xff]
        %739 = vset.pattern.permute.xlu0 0
        %740 = vperm.xlu0 %739, %v737
        %v741 = vpop.permute.xlu0 %740
        %vm743 = vcmask 105472
        %v745 = vsel %vm743, %v736, 0
        %vm747 = vcmask 1044480
        %v749 = vsel %vm747, %v734, 0
        %v752 = vsel %vm747, %v735, 0
        %754 = vmatprep.subr.mxu0 %v733
        %755 = vmatpush1.msra.mxu0 %v732
        %756 = vmatprep.subr.mxu0 %v752
        %757 = vmatpush1.msra.mxu0 %v749
        %758 = vmatprep.subr.mxu0 0.0
        %759 = vmatpush1.msra.mxu0 0.0
        %760 = vmatprep.subr.mxu0 0.0
        %761 = vmatpush1.msra.mxu0 0.0
        %762 = vmatprep.subr.mxu0 0.0
        %763 = vmatpush1.msra.mxu0 0.0
        %764 = vmatprep.subr.mxu0 0.0
        %765 = vmatpush1.msra.mxu0 0.0
        %766 = vmatprep.subr.mxu0 0.0
        %767 = vmatpush1.msra.mxu0 0.0
        %768 = vmatprep.subr.mxu0 0.0
        %769 = vmatpush1.msra.mxu0 0.0
        %770 = vmatprep.subr.mxu0 0.0
        %771 = vmatpush1.msra.mxu0 0.0
        %772 = vmatprep.subr.mxu0 0.0
        %773 = vmatpush1.msra.mxu0 0.0
        %774 = vmatprep.subr.mxu0 0.0
        %775 = vmatpush1.msra.mxu0 0.0
        %776 = vmatprep.subr.mxu0 0.0
        %777 = vmatpush1.msra.mxu0 0.0
        %778 = vmatprep.subr.mxu0 0.0
        %779 = vmatpush1.msra.mxu0 0.0
        %780 = vmatprep.subr.mxu0 0.0
        %781 = vmatpush1.msra.mxu0 0.0
        %782 = vmatprep.subr.mxu0 0.0
        %783 = vmatpush1.msra.mxu0 0.0
        %784 = vmatprep.subr.mxu0 0.0
        %785 = vmatpush1.msra.mxu0 0.0
        %786 = vmatprep.subr.mxu0 0.0
        %787 = vmatpush1.msra.mxu0 0.0
        %788 = vmatprep.subr.mxu0 0.0
        %789 = vmatpush1.msra.mxu0 0.0
        %790 = vmatprep.subr.mxu0 0.0
        %791 = vmatpush1.msra.mxu0 0.0
        %792 = vmatprep.subr.mxu0 0.0
        %793 = vmatpush1.msra.mxu0 0.0
        %794 = vmatprep.subr.mxu0 0.0
        %795 = vmatpush1.msra.mxu0 0.0
        %796 = vmatprep.subr.mxu0 0.0
        %797 = vmatpush1.msra.mxu0 0.0
        %798 = vmatprep.subr.mxu0 0.0
        %799 = vmatpush1.msra.mxu0 0.0
        %800 = vmatprep.subr.mxu0 0.0
        %801 = vmatpush1.msra.mxu0 0.0
        %802 = vmatprep.subr.mxu0 0.0
        %803 = vmatpush1.msra.mxu0 0.0
        %804 = vmatprep.subr.mxu0 0.0
        %805 = vmatpush1.msra.mxu0 0.0
        %806 = vmatprep.subr.mxu0 0.0
        %807 = vmatpush1.msra.mxu0 0.0
        %808 = vmatprep.subr.mxu0 0.0
        %809 = vmatpush1.msra.mxu0 0.0
        %810 = vmatprep.subr.mxu0 0.0
        %811 = vmatpush1.msra.mxu0 0.0
        %812 = vmatprep.subr.mxu0 0.0
        %813 = vmatpush1.msra.mxu0 0.0
        %814 = vmatprep.subr.mxu0 0.0
        %815 = vmatpush1.msra.mxu0 0.0
        %816 = vmatprep.subr.mxu0 0.0
        %817 = vmatpush1.msra.mxu0 0.0
        %818 = vmatprep.mubr.f32.mxu0 0.0
        %819 = vmatmul.mubr.f32.gmra.mrb[0].mxu0 %v745
        %v820 = vpop.f32.mrb[0].mxu0
        %v821 = vadd.f32 %v741, %v820
        %v822 = vpop.f32.mrb[0].mxu0
        %v823 = vadd.f32 %v741, %v822
        %824 = vdwg.mxu0
        %vm825 = vcmp.gt.f32.partialorder %v821, 20.0
        %vm826 = vcmp.gt.f32.partialorder %v823, 20.0
        %v827 = vmin.f32 %v821, 20.0
        %v828 = vmin.f32 %v823, 20.0
        %v829 = vmul.f32 %v827, 1.442695
        %v830 = vpow.pop %v829
        %v831 = vmul.f32 %v828, 1.442695
        %v832 = vpow.pop %v831
        %v833 = vadd.f32 %v830, 1.0
        %v834 = vlog2.pop %v833
        %v835 = vmul.f32 %v834, 0.6931472
        %v836 = vmul.f32 -0.5, %v830
        %v837 = vadd.f32 %v836, 1.0
        %v838 = vmul.f32 %v837, %v830
        %v839 = vand.u32 2147483647, %v830
        %vm840 = vcmp.lt.f32.partialorder %v839, 0.0004427343
        %v841 = vsel %vm840, %v838, %v835
        %v842 = vadd.f32 %v832, 1.0
        %v843 = vlog2.pop %v842
        %v844 = vmul.f32 %v843, 0.6931472
        %v845 = vmul.f32 -0.5, %v832
        %v846 = vadd.f32 %v845, 1.0
        %v847 = vmul.f32 %v846, %v832
        %v848 = vand.u32 2147483647, %v832
        %vm849 = vcmp.lt.f32.partialorder %v848, 0.0004427343
        %v850 = vsel %vm849, %v847, %v844
        %v851 = vsel %vm825, %v821, %v841
        %v852 = vsel %vm826, %v823, %v850
        %v853 = vld [vmem:[%s7] sm:$0x1f]
        %v854 = vld [vmem:[%s8] sm:$0x1f]
        %856 = vset.pattern.permute.xlu0 0
        %857 = vperm.xlu0 %856, %v854
        %v858 = vpop.permute.xlu0 %857
        %vm860 = vcmask 64512
        %v862 = vsel %vm860, %v853, 0
        %864 = vmatprep.subr.mxu0 %v852
        %865 = vmatpush1.msra.mxu0 %v851
        %866 = vmatprep.subr.mxu0 0.0
        %867 = vmatpush1.msra.mxu0 0.0
        %868 = vmatprep.subr.mxu0 0.0
        %869 = vmatpush1.msra.mxu0 0.0
        %870 = vmatprep.subr.mxu0 0.0
        %871 = vmatpush1.msra.mxu0 0.0
        %872 = vmatprep.subr.mxu0 0.0
        %873 = vmatpush1.msra.mxu0 0.0
        %874 = vmatprep.subr.mxu0 0.0
        %875 = vmatpush1.msra.mxu0 0.0
        %876 = vmatprep.subr.mxu0 0.0
        %877 = vmatpush1.msra.mxu0 0.0
        %878 = vmatprep.subr.mxu0 0.0
        %879 = vmatpush1.msra.mxu0 0.0
        %880 = vmatprep.subr.mxu0 0.0
        %881 = vmatpush1.msra.mxu0 0.0
        %882 = vmatprep.subr.mxu0 0.0
        %883 = vmatpush1.msra.mxu0 0.0
        %884 = vmatprep.subr.mxu0 0.0
        %885 = vmatpush1.msra.mxu0 0.0
        %886 = vmatprep.subr.mxu0 0.0
        %887 = vmatpush1.msra.mxu0 0.0
        %888 = vmatprep.subr.mxu0 0.0
        %889 = vmatpush1.msra.mxu0 0.0
        %890 = vmatprep.subr.mxu0 0.0
        %891 = vmatpush1.msra.mxu0 0.0
        %892 = vmatprep.subr.mxu0 0.0
        %893 = vmatpush1.msra.mxu0 0.0
        %894 = vmatprep.subr.mxu0 0.0
        %895 = vmatpush1.msra.mxu0 0.0
        %896 = vmatprep.subr.mxu0 0.0
        %897 = vmatpush1.msra.mxu0 0.0
        %898 = vmatprep.subr.mxu0 0.0
        %899 = vmatpush1.msra.mxu0 0.0
        %900 = vmatprep.subr.mxu0 0.0
        %901 = vmatpush1.msra.mxu0 0.0
        %902 = vmatprep.subr.mxu0 0.0
        %903 = vmatpush1.msra.mxu0 0.0
        %904 = vmatprep.subr.mxu0 0.0
        %905 = vmatpush1.msra.mxu0 0.0
        %906 = vmatprep.subr.mxu0 0.0
        %907 = vmatpush1.msra.mxu0 0.0
        %908 = vmatprep.subr.mxu0 0.0
        %909 = vmatpush1.msra.mxu0 0.0
        %910 = vmatprep.subr.mxu0 0.0
        %911 = vmatpush1.msra.mxu0 0.0
        %912 = vmatprep.subr.mxu0 0.0
        %913 = vmatpush1.msra.mxu0 0.0
        %914 = vmatprep.subr.mxu0 0.0
        %915 = vmatpush1.msra.mxu0 0.0
        %916 = vmatprep.subr.mxu0 0.0
        %917 = vmatpush1.msra.mxu0 0.0
        %918 = vmatprep.subr.mxu0 0.0
        %919 = vmatpush1.msra.mxu0 0.0
        %920 = vmatprep.subr.mxu0 0.0
        %921 = vmatpush1.msra.mxu0 0.0
        %922 = vmatprep.subr.mxu0 0.0
        %923 = vmatpush1.msra.mxu0 0.0
        %924 = vmatprep.subr.mxu0 0.0
        %925 = vmatpush1.msra.mxu0 0.0
        %926 = vmatprep.subr.mxu0 0.0
        %927 = vmatpush1.msra.mxu0 0.0
        %928 = vmatprep.mubr.f32.mxu0 0.0
        %929 = vmatmul.mubr.f32.gmra.mrb[0].mxu0 %v862
        %v930 = vpop.f32.mrb[0].mxu0
        %v931 = vadd.f32 %v858, %v930
        %v932 = vpop.f32.mrb[0].mxu0
        %v933 = vadd.f32 %v858, %v932
        %934 = vdwg.mxu0
        %v935 = vlaneseq
        %v936 = vshrl.u32 %v935, 7
        %vm937 = vcmp.ge.s32.totalorder %v936, 2
        %vm938 = vcmp.lt.s32.totalorder %v936, 4
        %vm939 = vmand %vm937, %vm938
        %vm940 = vcmp.gt.f32.partialorder %v931, 20.0
        %vm941 = vcmp.gt.f32.partialorder %v933, 20.0
        %v942 = vmin.f32 %v931, 20.0
        %v943 = vmin.f32 %v933, 20.0
        %v944 = vmul.f32 %v942, 1.442695
        %v945 = vpow.pop %v944
        %v946 = vmul.f32 %v943, 1.442695
        %v947 = vpow.pop %v946
        %v948 = vadd.f32 %v945, 1.0
        %v949 = vlog2.pop %v948
        %v950 = vmul.f32 %v949, 0.6931472
        %v951 = vmul.f32 -0.5, %v945
        %v952 = vadd.f32 %v951, 1.0
        %v953 = vmul.f32 %v952, %v945
        %v954 = vand.u32 2147483647, %v945
        %vm955 = vcmp.lt.f32.partialorder %v954, 0.0004427343
        %v956 = vsel %vm955, %v953, %v950
        %v957 = vadd.f32 %v947, 1.0
        %v958 = vlog2.pop %v957
        %v959 = vmul.f32 %v958, 0.6931472
        %v960 = vmul.f32 -0.5, %v947
        %v961 = vadd.f32 %v960, 1.0
        %v962 = vmul.f32 %v961, %v947
        %v963 = vand.u32 2147483647, %v947
        %vm964 = vcmp.lt.f32.partialorder %v963, 0.0004427343
        %v965 = vsel %vm964, %v962, %v959
        %v966 = vsel %vm940, %v931, %v956
        %v967 = vsel %vm941, %v933, %v965
        %v968 = vsel %vm939, %v966, %v931
        %v969 = vsel %vm939, %v967, %v933
        %970 = vst [vmem:[%s367] sm:$0x1f] %v968
        %971 = vst [vmem:[%s367 + $0x8] sm:$0x1f] %v969
        %s972 = smul.u32 2, %s20
        %p973 = scmp.lt.s32.totalorder %s972, 3
        %s974 = scalar_select %p973, %s972, 3
        %s975 = smul.addr %s974, 8
        %s976 = scalar_lea.vmem %s9, %s975
        // Predicated region
        $region80: #{mlp_multivariate_gaussian.1} parent=74 // pred_check
          %p977 = pneg %p232
        $region81: #{mlp_multivariate_gaussian.1} parent=74 // pred_check_branch
          %979 = sbr.rel (%p977) target = $region83
        $region82: #{mlp_multivariate_gaussian.1} parent=74 // pred_region
          %s980 = smul.u32 2, %s20
        $region83: #{mlp_multivariate_gaussian.1} parent=74 // pred_fallthru
          _
      $region75: #{mlp_multivariate_gaussian.1} parent=5 // pred_fallthru
        _
      %p981 = scmp.le.s32.totalorder 2, %s15
      // Predicated region
      $region84: #{mlp_multivariate_gaussian.1} parent=5 // pred_check
        %p982 = pneg %p981
      $region85: #{mlp_multivariate_gaussian.1} parent=5 // pred_check_branch
        %984 = sbr.rel (%p982) target = $region87
      $region86: #{mlp_multivariate_gaussian.1} parent=5 // pred_region
        %s985 = ssub.s32 %s15, 2
        // Predicated region
        $region88: #{mlp_multivariate_gaussian.1} parent=86 // pred_check
          %p986 = pneg %p238
        $region89: #{mlp_multivariate_gaussian.1} parent=86 // pred_check_branch
          %988 = sbr.rel (%p986) target = $region91
        $region90: #{mlp_multivariate_gaussian.1} parent=86 // pred_region
          %s989 = smul.u32 2, %s21
          %p990 = scmp.lt.s32.totalorder %s989, 3
          %s991 = scalar_select %p990, %s989, 3
          %s992 = smul.addr %s991, 8
          %s993 = scalar_lea.vmem %s9, %s992
        $region91: #{mlp_multivariate_gaussian.1} parent=86 // pred_fallthru
          _
      $region87: #{mlp_multivariate_gaussian.1} parent=5 // pred_fallthru
        _
    $region6: #{mlp_multivariate_gaussian.1} parent=1 // loop_footer
      %s19 = sadd.s32 1, %s15
    $region7: #{mlp_multivariate_gaussian.1} parent=1 // loop_footer_branch
      %14 = sbr.rel target = $region3
    $region8: #{mlp_multivariate_gaussian.1} parent=1 // loop_exit
      _

</llo_original>
